<compile_context>
chip_gen: v7x
topology: tpu7x:2x2x1
jax: 0.10.0
libtpu: 0.0.40
codegen_flags: <defaults>
</compile_context>

<pallas_src>
import functools

import numpy as np
import jax
import jax.numpy as jnp
from jax import lax
from jax.experimental import pallas as pl
from jax.experimental.pallas import tpu as pltpu


def _round_up(v, m):
    return ((v + m - 1) // m) * m


def _default_core_splits():
    """2 batch splits on megacore chips (v7x/v4/v5p), 1 on single-TC v5e/v6e."""
    try:
        kind = str(jax.devices()[0].device_kind).lower()
    except Exception:
        return 1
    if "lite" in kind or "v5e" in kind or "v6e" in kind:
        return 1
    for tag in ("v7", "v4", "v5p"):
        if tag in kind:
            return 2
    return 1


def _penalty_loss_kernel(penalty_weight, num_ineq, batch, needs_mask,
                         w_ref, x_ref, c_ref, out_ref, viol_acc, px_acc):
    # Zero the tiny lane-resident accumulators at the start of each core's sweep.
    @pl.when(pl.program_id(1) == 0)
    def _():
        viol_acc[...] = jnp.zeros_like(viol_acc)
        px_acc[...] = jnp.zeros_like(px_acc)

    x = x_ref[...]                        # (TB, num_var)
    w_aug_t = w_ref[...]                  # (num_var, num_ineq + 1)
    c = c_ref[...]                        # (TB, num_ineq)

    # Single fused MXU matmul: columns [:num_ineq] are the constraint LHS,
    # column num_ineq is the profit dot-product p.x.
    s = jnp.dot(x, w_aug_t, preferred_element_type=jnp.float32)    # (TB, ni+1)
    relu_part = jnp.maximum(s[:, :num_ineq] - c, 0.0)              # (TB, ni)

    if needs_mask:
        # Ragged tail handled in-kernel: rows with logical index >= batch are
        # masked out BEFORE accumulation (their buffer contents are undefined).
        tb = x_ref.shape[0]
        block_idx = pl.program_id(0) * pl.num_programs(1) + pl.program_id(1)
        row0 = block_idx * tb
        rows = lax.broadcasted_iota(jnp.int32, (tb, 1), 0) + row0
        valid = rows < batch
        relu_part = jnp.where(valid, relu_part, 0.0)
        s = jnp.where(valid, s, 0.0)

    # Per-tile column sums -> 1-vreg accumulators (no lane-sparse per-row acc).
    viol_acc[...] += jnp.sum(relu_part, axis=0, keepdims=True)               # (1, ni)
    px_acc[...] += jnp.sum(s, axis=0, keepdims=True)[:, num_ineq:num_ineq + 1]  # (1, 1)

    # Last inner tile for this core: one tiny lane reduce, apply the penalty
    # weight / sign once, and emit this core's partial sum as a lane-dense
    # 128-wide output block.
    @pl.when(pl.program_id(1) == pl.num_programs(1) - 1)
    def _():
        viol_sum = jnp.sum(viol_acc[...], axis=1, keepdims=True)   # (1, 1)
        psum = penalty_weight * viol_sum - px_acc[...]             # (1, 1)
        out_ref[...] = jnp.broadcast_to(psum, out_ref.shape)       # (1, 128)


def _penalty_loss_from_waug(w_aug_t, x, c, *, penalty_weight, tile_b, num_core_splits):
    num_var = x.shape[1]
    num_ineq = c.shape[1]
    B = x.shape[0]
    assert w_aug_t.shape == (num_var, num_ineq + 1)

    f32 = jnp.float32
    x = x.astype(f32)
    c = c.astype(f32)
    w_aug_t = w_aug_t.astype(f32)

    # Tile sizing: big sublane-aligned (multiple of 8) batch tiles, split
    # across `nc` outer "parallel" iterations only on megacore chips.
    nc_req = _default_core_splits() if num_core_splits is None else int(num_core_splits)
    nc = max(1, min(nc_req, max(1, B // 8)))       # never hand a core < 8 rows
    per_core = -(-B // nc)                          # ceil(B / nc)
    tb = max(8, min(int(tile_b), _round_up(per_core, 8)))
    t = -(-per_core // tb)                          # inner tiles per core
    padded_b = nc * t * tb
    needs_mask = (padded_b != B)                    # ragged tail -> in-kernel mask

    kernel = functools.partial(_penalty_loss_kernel,
                               float(penalty_weight), int(num_ineq),
                               int(B), bool(needs_mask))

    out = pl.pallas_call(
        kernel,
        out_shape=jax.ShapeDtypeStruct((1, nc * 128), jnp.float32),
        grid_spec=pltpu.PrefetchScalarGridSpec(
            num_scalar_prefetch=0,
            grid=(nc, t),
            in_specs=[
                pl.BlockSpec((num_var, num_ineq + 1), lambda b, i: (0, 0)),  # w_aug_t
                pl.BlockSpec((tb, num_var), lambda b, i: (b * t + i, 0)),    # x
                pl.BlockSpec((tb, num_ineq), lambda b, i: (b * t + i, 0)),   # c
            ],
            out_specs=pl.BlockSpec((1, 128), lambda b, i: (0, b)),
            scratch_shapes=[
                pltpu.VMEM((1, num_ineq), jnp.float32),   # violation column sums
                pltpu.VMEM((1, 1), jnp.float32),          # profit (p.x) sum
            ],
        ),
        compiler_params=pltpu.CompilerParams(
            dimension_semantics=("parallel", "arbitrary"),
            vmem_limit_bytes=48 * 1024 * 1024),
    )(w_aug_t, x, c)

    partials = out.reshape(nc, 128)[:, 0]                   # one partial per core
    return jnp.sum(partials) / jnp.float32(B)


def make_penalty_loss(p, w, penalty_weight=50.0, tile_b=8192, num_core_splits=None):
    """Factory: precompute the fused [w; p]^T matrix once (it is fixed per
    problem instance) and return a jitted loss(x, c) callable."""
    p2d = jnp.asarray(p, jnp.float32).reshape(1, -1)
    w = jnp.asarray(w, jnp.float32)
    w_aug_t = jnp.concatenate([w, p2d], axis=0).T            # (num_var, num_ineq+1)

    @jax.jit
    def loss_fn(x, c):
        return _penalty_loss_from_waug(w_aug_t, x, c,
                                       penalty_weight=penalty_weight,
                                       tile_b=tile_b,
                                       num_core_splits=num_core_splits)

    return loss_fn


def penalty_loss(p, w, x, c, penalty_weight=50.0, tile_b=8192, num_core_splits=None):
    """One-shot convenience wrapper (rebuilds w_aug_t; prefer make_penalty_loss
    in a training loop). Note: penalty_weight is baked in as a compile-time
    constant, so changing it triggers a recompile."""
    return make_penalty_loss(p, w, penalty_weight, tile_b, num_core_splits)(x, c)


def penalty_loss_ref(p, w, x, c, penalty_weight=50.0):
    obj = -jnp.einsum('m,bm->b', p, x)
    lhs = jnp.einsum('ij,bj->bi', w, x)
    viol = jnp.sum(jax.nn.relu(lhs - c), axis=1)
    return jnp.mean(obj + penalty_weight * viol)


if __name__ == "__main__":
    # Problem sizes consistent with the module's num_var / num_ineq; a batch
    # that is NOT a tile multiple exercises the in-kernel tail-mask path.
    num_var, num_ineq, B = 32, 16, 200
    penalty_weight = 50.0

    # TODO(synk): original p/w come from MultiKnapsackGenerator (scipy/np RNG);
    #             recreated deterministically here instead of that generator.
    rng = np.random.RandomState(17)
    w_np = rng.uniform(0.0, 60.0, size=(num_ineq, num_var)).astype(np.float32)
    p_np = (rng.uniform(0.75, 1.25, size=(num_var,)) *
            w_np.mean(axis=0)).astype(np.float32)

    p = jnp.asarray(p_np)
    w = jnp.asarray(w_np)

    key = jax.random.PRNGKey(0)
    kx, kc = jax.random.split(key)
    x = jax.random.uniform(kx, (B, num_var), dtype=jnp.float32)        # relaxed solution
    c = jax.random.uniform(kc, (B, num_ineq), dtype=jnp.float32,
                           minval=100.0, maxval=400.0)                 # capacities

    loss_fn = make_penalty_loss(p, w, penalty_weight)
    out = jax.block_until_ready(loss_fn(x, c))
    ref = jax.block_until_ready(penalty_loss_ref(p, w, x, c, penalty_weight))

    np.testing.assert_allclose(np.asarray(out), np.asarray(ref),
                               rtol=1e-4, atol=1e-2)
    print("KERNEL_OK")
</pallas_src>

<mosaic_0001>
module attributes {stable_mosaic.version = 11 : i64} {
  func.func @_penalty_loss_kernel(%arg0: i32, %arg1: i32, %arg2: memref<32x17xf32, #tpu.memory_space<vmem>>, %arg3: memref<200x32xf32, #tpu.memory_space<vmem>>, %arg4: memref<200x16xf32, #tpu.memory_space<vmem>>, %arg5: memref<1x128xf32, #tpu.memory_space<vmem>>, %arg6: memref<1x16xf32, #tpu.memory_space<vmem>>, %arg7: memref<1x1xf32, #tpu.memory_space<vmem>>) attributes {dimension_semantics = [#tpu.dimension_semantics<parallel>, #tpu.dimension_semantics<arbitrary>], iteration_bounds = array<i64: 1, 1>, scalar_prefetch = 0 : i64, scratch_operands = 2 : i64, tpu.core_type = #tpu.core_type<tc>, window_params = [{pipeline_mode = #tpu.pipeline_mode<synchronous>, transform_indices = @transform_0, window_bounds = array<i64: 32, 17>}, {transform_indices = @transform_1, window_bounds = array<i64: 200, 32>}, {transform_indices = @transform_2, window_bounds = array<i64: 200, 16>}, {transform_indices = @transform_3, window_bounds = array<i64: 1, 128>}]} {
    %c0_i32 = arith.constant 0 : i32
    %0 = arith.cmpi eq, %arg1, %c0_i32 : i32
    %1 = arith.extui %0 : i1 to i32
    %c0_i32_0 = arith.constant 0 : i32
    %2 = arith.cmpi ne, %1, %c0_i32_0 : i32
    scf.if %2 {
      %cst_19 = arith.constant 0.000000e+00 : f32
      %25 = vector.broadcast %cst_19 : f32 to vector<1x16xf32>
      %c0_20 = arith.constant 0 : index
      %c0_21 = arith.constant 0 : index
      %26 = vector.load %arg6[%c0_20, %c0_21] : memref<1x16xf32, #tpu.memory_space<vmem>>, vector<1x16xf32>
      tpu.vector_store %arg6[%c0_20, %c0_21], %25 {strides = array<i32>} : memref<1x16xf32, #tpu.memory_space<vmem>>, vector<1x16xf32>,
      %cst_22 = arith.constant 0.000000e+00 : f32
      %27 = vector.broadcast %cst_22 : f32 to vector<1x1xf32>
      %c0_23 = arith.constant 0 : index
      %c0_24 = arith.constant 0 : index
      %28 = vector.load %arg7[%c0_23, %c0_24] : memref<1x1xf32, #tpu.memory_space<vmem>>, vector<1x1xf32>
      tpu.vector_store %arg7[%c0_23, %c0_24], %27 {strides = array<i32>} : memref<1x1xf32, #tpu.memory_space<vmem>>, vector<1x1xf32>,
    } else {
    }
    %c0 = arith.constant 0 : index
    %c0_1 = arith.constant 0 : index
    %3 = vector.load %arg3[%c0, %c0_1] : memref<200x32xf32, #tpu.memory_space<vmem>>, vector<200x32xf32>
    %c0_2 = arith.constant 0 : index
    %c0_3 = arith.constant 0 : index
    %4 = vector.load %arg2[%c0_2, %c0_3] : memref<32x17xf32, #tpu.memory_space<vmem>>, vector<32x17xf32>
    %c0_4 = arith.constant 0 : index
    %c0_5 = arith.constant 0 : index
    %5 = vector.load %arg4[%c0_4, %c0_5] : memref<200x16xf32, #tpu.memory_space<vmem>>, vector<200x16xf32>
    %cst = arith.constant dense<0.000000e+00> : vector<200x17xf32>
    %6 = tpu.matmul %3, %4, %cst {dimension_numbers = #tpu.dot_dimension_numbers<[1], [0], [0], [1], [0, 0, 1, 1], [], []>} : vector<200x32xf32>, vector<32x17xf32>, vector<200x17xf32> -> vector<200x17xf32>
    %7 = vector.extract_strided_slice %6 {offsets = [0, 0], sizes = [200, 16], strides = [1, 1]} : vector<200x17xf32> to vector<200x16xf32>
    %8 = arith.subf %7, %5 : vector<200x16xf32>
    %cst_6 = arith.constant 0.000000e+00 : f32
    %9 = vector.broadcast %cst_6 : f32 to vector<200x16xf32>
    %10 = arith.maximumf %8, %9 : vector<200x16xf32>
    %c0_7 = arith.constant 0 : index
    %c0_8 = arith.constant 0 : index
    %11 = vector.load %arg6[%c0_7, %c0_8] : memref<1x16xf32, #tpu.memory_space<vmem>>, vector<1x16xf32>
    %cst_9 = arith.constant dense<0.000000e+00> : vector<16xf32>
    %12 = vector.multi_reduction <add>, %10, %cst_9 [0] : vector<200x16xf32> to vector<16xf32>
    %13 = vector.shape_cast %12 : vector<16xf32> to vector<1x16xf32>
    %14 = arith.addf %11, %13 : vector<1x16xf32>
    %c0_10 = arith.constant 0 : index
    %c0_11 = arith.constant 0 : index
    %15 = vector.load %arg6[%c0_10, %c0_11] : memref<1x16xf32, #tpu.memory_space<vmem>>, vector<1x16xf32>
    tpu.vector_store %arg6[%c0_10, %c0_11], %14 {strides = array<i32>} : memref<1x16xf32, #tpu.memory_space<vmem>>, vector<1x16xf32>,
    %c0_12 = arith.constant 0 : index
    %c0_13 = arith.constant 0 : index
    %16 = vector.load %arg7[%c0_12, %c0_13] : memref<1x1xf32, #tpu.memory_space<vmem>>, vector<1x1xf32>
    %cst_14 = arith.constant dense<0.000000e+00> : vector<17xf32>
    %17 = vector.multi_reduction <add>, %6, %cst_14 [0] : vector<200x17xf32> to vector<17xf32>
    %18 = vector.shape_cast %17 : vector<17xf32> to vector<1x17xf32>
    %19 = vector.extract_strided_slice %18 {offsets = [0, 16], sizes = [1, 1], strides = [1, 1]} : vector<1x17xf32> to vector<1x1xf32>
    %20 = arith.addf %16, %19 : vector<1x1xf32>
    %c0_15 = arith.constant 0 : index
    %c0_16 = arith.constant 0 : index
    %21 = vector.load %arg7[%c0_15, %c0_16] : memref<1x1xf32, #tpu.memory_space<vmem>>, vector<1x1xf32>
    tpu.vector_store %arg7[%c0_15, %c0_16], %20 {strides = array<i32>} : memref<1x1xf32, #tpu.memory_space<vmem>>, vector<1x1xf32>,
    %c0_i32_17 = arith.constant 0 : i32
    %22 = arith.cmpi eq, %arg1, %c0_i32_17 : i32
    %23 = arith.extui %22 : i1 to i32
    %c0_i32_18 = arith.constant 0 : i32
    %24 = arith.cmpi ne, %23, %c0_i32_18 : i32
    scf.if %24 {
      %c0_19 = arith.constant 0 : index
      %c0_20 = arith.constant 0 : index
      %25 = vector.load %arg6[%c0_19, %c0_20] : memref<1x16xf32, #tpu.memory_space<vmem>>, vector<1x16xf32>
      %cst_21 = arith.constant dense<0.000000e+00> : vector<1xf32>
      %26 = vector.multi_reduction <add>, %25, %cst_21 [1] : vector<1x16xf32> to vector<1xf32>
      %27 = vector.shape_cast %26 : vector<1xf32> to vector<1x1xf32>
      %cst_22 = arith.constant 5.000000e+01 : f32
      %28 = vector.broadcast %cst_22 : f32 to vector<1x1xf32>
      %29 = arith.mulf %28, %27 : vector<1x1xf32>
      %c0_23 = arith.constant 0 : index
      %c0_24 = arith.constant 0 : index
      %30 = vector.load %arg7[%c0_23, %c0_24] : memref<1x1xf32, #tpu.memory_space<vmem>>, vector<1x1xf32>
      %31 = arith.subf %29, %30 : vector<1x1xf32>
      %32 = vector.shape_cast %31 : vector<1x1xf32> to vector<1x1xf32>
      %33 = vector.broadcast %32 : vector<1x1xf32> to vector<1x128xf32>
      %c0_25 = arith.constant 0 : index
      %c0_26 = arith.constant 0 : index
      %34 = vector.load %arg5[%c0_25, %c0_26] : memref<1x128xf32, #tpu.memory_space<vmem>>, vector<1x128xf32>
      tpu.vector_store %arg5[%c0_25, %c0_26], %33 {strides = array<i32>} : memref<1x128xf32, #tpu.memory_space<vmem>>, vector<1x128xf32>,
    } else {
    }
    return
  }
  func.func @transform_0(%arg0: i32, %arg1: i32) -> (i32, i32) {
    %c0_i32 = arith.constant 0 : i32
    %c0_i32_0 = arith.constant 0 : i32
    %c0_i32_1 = arith.constant 0 : i32
    return %c0_i32, %c0_i32_0 : i32, i32
  }
  func.func @transform_1(%arg0: i32, %arg1: i32) -> (i32, i32) {
    %c1_i32 = arith.constant 1 : i32
    %0 = arith.muli %arg0, %c1_i32 : i32
    %1 = arith.addi %0, %arg1 : i32
    %c0_i32 = arith.constant 0 : i32
    %c0_i32_0 = arith.constant 0 : i32
    return %1, %c0_i32 : i32, i32
  }
  func.func @transform_2(%arg0: i32, %arg1: i32) -> (i32, i32) {
    %c1_i32 = arith.constant 1 : i32
    %0 = arith.muli %arg0, %c1_i32 : i32
    %1 = arith.addi %0, %arg1 : i32
    %c0_i32 = arith.constant 0 : i32
    %c0_i32_0 = arith.constant 0 : i32
    return %1, %c0_i32 : i32, i32
  }
  func.func @transform_3(%arg0: i32, %arg1: i32) -> (i32, i32) {
    %c0_i32 = arith.constant 0 : i32
    %c0_i32_0 = arith.constant 0 : i32
    return %c0_i32, %arg0 : i32, i32
  }
}

</mosaic_0001>

<llo_original>
// kernel: loss_fn.1
$region0: #{loss_fn.1}
  #allocation0 [shape = 'u32[]', space=smem, size = 0x4, offset = 0x4, fixed_abs, tag = 'smem constant byte address 0x4 - core index']
  #allocation1 [shape = 'u32[144,128]{1,0:T(1,128)}', space=vmem, size = 0x12000, scoped, tag = 'internal scratch']
  #allocation2 [shape = 'f32[1,16]{1,0:T(1,128)}', space=vmem, size = 0x200, scoped, tag = 'scratch operand']
  #allocation3 [shape = 'f32[1,1]{1,0:T(1,128)}', space=vmem, size = 0x200, scoped, tag = 'scratch operand']
  %s0 = inlined_call_operand.vmem [shape: f32[32,17], index: 0, kind: input, shape index: {}]
  %s1 = inlined_call_operand.vmem [shape: f32[200,32], index: 1, kind: input, shape index: {}]
  %s2 = inlined_call_operand.vmem [shape: f32[200,16], index: 2, kind: input, shape index: {}]
  %s3 = inlined_call_operand.vmem [shape: f32[1,128], index: 3, kind: output, shape index: {}]
  %s4 = sld [smem:[#allocation0]]
  $region30: #{loss_fn.1} parent=0
    _
  %s6 = ssub.s32 1, %s4
  %s7 = scalar_select 0, %s6, %s4
  // Predicated region
  $region2: #{loss_fn.1} parent=0 // pred_check
    _
  $region3: #{loss_fn.1} parent=0 // pred_check_branch
    %9 = sbr.rel (0) target = $region5
  $region4: #{loss_fn.1} parent=0 // pred_region
    _
  $region5: #{loss_fn.1} parent=0 // pred_fallthru
    _
  // Predicated region
  $region6: #{loss_fn.1} parent=0 // pred_check
    _
  $region7: #{loss_fn.1} parent=0 // pred_check_branch
    %11 = sbr.rel (0) target = $region9
  $region8: #{loss_fn.1} parent=0 // pred_region
    %s12 = sadd.s32 0, 0
    %s13 = smul.u32 25, %s12
    %p14 = scmp.lt.s32.totalorder %s13, 24
    %s15 = scalar_select %p14, %s13, 24
    %s16 = smul.addr %s15, 8
    %s17 = scalar_lea.vmem %s1, %s16
    %s18 = sadd.s32 0, 0
    %s19 = smul.u32 25, %s18
  $region9: #{loss_fn.1} parent=0 // pred_fallthru
    _
  // Predicated region
  $region10: #{loss_fn.1} parent=0 // pred_check
    _
  $region11: #{loss_fn.1} parent=0 // pred_check_branch
    %21 = sbr.rel (0) target = $region13
  $region12: #{loss_fn.1} parent=0 // pred_region
    %s22 = sadd.s32 0, 0
    %s23 = smul.u32 25, %s22
    %p24 = scmp.lt.s32.totalorder %s23, 24
    %s25 = scalar_select %p24, %s23, 24
    %s26 = smul.addr %s25, 8
    %s27 = scalar_lea.vmem %s2, %s26
    %s28 = sadd.s32 0, 0
    %s29 = smul.u32 25, %s28
  $region13: #{loss_fn.1} parent=0 // pred_fallthru
    _
  %s30 = sadd.s32 0, 0
  %s31 = smul.u32 25, %s30
  %p32 = scmp.lt.s32.totalorder %s31, 24
  %s33 = scalar_select %p32, %s31, 24
  %s34 = smul.addr %s33, 8
  %s35 = scalar_lea.vmem %s1, %s34
  %s36 = sadd.s32 0, 0
  %s37 = smul.u32 25, %s36
  %p38 = scmp.lt.s32.totalorder %s37, 24
  %s39 = scalar_select %p38, %s37, 24
  %s40 = smul.addr %s39, 8
  %s41 = scalar_lea.vmem %s2, %s40
  %s42 = sadd.s32 0, 0
  %s43 = smul.u32 25, %s42
  %p44 = scmp.lt.s32.totalorder %s43, 24
  %s45 = scalar_select %p44, %s43, 24
  %s46 = smul.addr %s45, 8
  %s47 = scalar_lea.vmem %s1, %s46
  %s48 = sadd.s32 0, 0
  %s49 = smul.u32 25, %s48
  %s50 = sadd.s32 0, 0
  %s51 = smul.u32 25, %s50
  %p52 = scmp.lt.s32.totalorder %s51, 24
  %s53 = scalar_select %p52, %s51, 24
  %s54 = smul.addr %s53, 8
  %s55 = scalar_lea.vmem %s2, %s54
  %s56 = sadd.s32 0, 0
  %s57 = smul.u32 25, %s56
  %p58 = scmp.eq.s32.totalorder 0, 0
  // Predicated region
  $region14: #{loss_fn.1} parent=0 // pred_check
    %p59 = pneg %p58
  $region15: #{loss_fn.1} parent=0 // pred_check_branch
    %61 = sbr.rel (%p59) target = $region17
  $region16: #{loss_fn.1} parent=0 // pred_region
    %vm62 = vcmask 122880
    %63 = vst.msk [vmem:[#allocation2] sm:$0x1] %vm62, 0.0
    %vm64 = vcmask 0
    %65 = vst.msk [vmem:[#allocation3] sm:$0x1] %vm64, 0.0
  $region17: #{loss_fn.1} parent=0 // pred_fallthru
    _
  %v66 = vld [vmem:[%s47] sm:$0xff]
  %v67 = vld [vmem:[%s47 + $0x8] sm:$0xff]
  %v68 = vld [vmem:[%s47 + $0x10] sm:$0xff]
  %v69 = vld [vmem:[%s47 + $0x18] sm:$0xff]
  %v70 = vld [vmem:[%s47 + $0x20] sm:$0xff]
  %v71 = vld [vmem:[%s47 + $0x28] sm:$0xff]
  %v72 = vld [vmem:[%s47 + $0x30] sm:$0xff]
  %v73 = vld [vmem:[%s47 + $0x38] sm:$0xff]
  %v74 = vld [vmem:[%s47 + $0x40] sm:$0xff]
  %v75 = vld [vmem:[%s47 + $0x48] sm:$0xff]
  %v76 = vld [vmem:[%s47 + $0x50] sm:$0xff]
  %v77 = vld [vmem:[%s47 + $0x58] sm:$0xff]
  %v78 = vld [vmem:[%s47 + $0x60] sm:$0xff]
  %v79 = vld [vmem:[%s47 + $0x68] sm:$0xff]
  %v80 = vld [vmem:[%s47 + $0x70] sm:$0xff]
  %v81 = vld [vmem:[%s47 + $0x78] sm:$0xff]
  %v82 = vld [vmem:[%s47 + $0x80] sm:$0xff]
  %v83 = vld [vmem:[%s47 + $0x88] sm:$0xff]
  %v84 = vld [vmem:[%s47 + $0x90] sm:$0xff]
  %v85 = vld [vmem:[%s47 + $0x98] sm:$0xff]
  %v86 = vld [vmem:[%s47 + $0xa0] sm:$0xff]
  %v87 = vld [vmem:[%s47 + $0xa8] sm:$0xff]
  %v88 = vld [vmem:[%s47 + $0xb0] sm:$0xff]
  %v89 = vld [vmem:[%s47 + $0xb8] sm:$0xff]
  %v90 = vld [vmem:[%s47 + $0xc0] sm:$0xff]
  %v91 = vld [vmem:[%s0] sm:$0xff]
  %v92 = vld [vmem:[%s0 + $0x8] sm:$0xff]
  %v93 = vld [vmem:[%s0 + $0x10] sm:$0xff]
  %v94 = vld [vmem:[%s0 + $0x18] sm:$0xff]
  %v95 = vld [vmem:[%s55] sm:$0xff]
  %v96 = vld [vmem:[%s55 + $0x8] sm:$0xff]
  %v97 = vld [vmem:[%s55 + $0x10] sm:$0xff]
  %v98 = vld [vmem:[%s55 + $0x18] sm:$0xff]
  %v99 = vld [vmem:[%s55 + $0x20] sm:$0xff]
  %v100 = vld [vmem:[%s55 + $0x28] sm:$0xff]
  %v101 = vld [vmem:[%s55 + $0x30] sm:$0xff]
  %v102 = vld [vmem:[%s55 + $0x38] sm:$0xff]
  %v103 = vld [vmem:[%s55 + $0x40] sm:$0xff]
  %v104 = vld [vmem:[%s55 + $0x48] sm:$0xff]
  %v105 = vld [vmem:[%s55 + $0x50] sm:$0xff]
  %v106 = vld [vmem:[%s55 + $0x58] sm:$0xff]
  %v107 = vld [vmem:[%s55 + $0x60] sm:$0xff]
  %v108 = vld [vmem:[%s55 + $0x68] sm:$0xff]
  %v109 = vld [vmem:[%s55 + $0x70] sm:$0xff]
  %v110 = vld [vmem:[%s55 + $0x78] sm:$0xff]
  %v111 = vld [vmem:[%s55 + $0x80] sm:$0xff]
  %v112 = vld [vmem:[%s55 + $0x88] sm:$0xff]
  %v113 = vld [vmem:[%s55 + $0x90] sm:$0xff]
  %v114 = vld [vmem:[%s55 + $0x98] sm:$0xff]
  %v115 = vld [vmem:[%s55 + $0xa0] sm:$0xff]
  %v116 = vld [vmem:[%s55 + $0xa8] sm:$0xff]
  %v117 = vld [vmem:[%s55 + $0xb0] sm:$0xff]
  %v118 = vld [vmem:[%s55 + $0xb8] sm:$0xff]
  %v119 = vld [vmem:[%s55 + $0xc0] sm:$0xff]
  %vm120 = vcmask 261120
  %v122 = vsel %vm120, %v66, 0
  %v125 = vsel %vm120, %v67, 0
  %v128 = vsel %vm120, %v68, 0
  %v131 = vsel %vm120, %v69, 0
  %v134 = vsel %vm120, %v70, 0
  %v137 = vsel %vm120, %v71, 0
  %v140 = vsel %vm120, %v72, 0
  %v143 = vsel %vm120, %v73, 0
  %v146 = vsel %vm120, %v74, 0
  %v149 = vsel %vm120, %v75, 0
  %v152 = vsel %vm120, %v76, 0
  %v155 = vsel %vm120, %v77, 0
  %v158 = vsel %vm120, %v78, 0
  %v161 = vsel %vm120, %v79, 0
  %v164 = vsel %vm120, %v80, 0
  %v167 = vsel %vm120, %v81, 0
  %v170 = vsel %vm120, %v82, 0
  %v173 = vsel %vm120, %v83, 0
  %v176 = vsel %vm120, %v84, 0
  %v179 = vsel %vm120, %v85, 0
  %v182 = vsel %vm120, %v86, 0
  %v185 = vsel %vm120, %v87, 0
  %v188 = vsel %vm120, %v88, 0
  %v191 = vsel %vm120, %v89, 0
  %v194 = vsel %vm120, %v90, 0
  %196 = vmatprep.subr.mxu0 0.0
  %197 = vmatpush1.msra.mxu0 %v91
  %198 = vmatprep.subr.mxu0 0.0
  %199 = vmatpush1.msra.mxu0 %v92
  %200 = vmatprep.subr.mxu0 0.0
  %201 = vmatpush1.msra.mxu0 %v93
  %202 = vmatprep.subr.mxu0 0.0
  %203 = vmatpush1.msra.mxu0 %v94
  %204 = vmatprep.subr.mxu0 0.0
  %205 = vmatpush1.msra.mxu0 0.0
  %206 = vmatprep.subr.mxu0 0.0
  %207 = vmatpush1.msra.mxu0 0.0
  %208 = vmatprep.subr.mxu0 0.0
  %209 = vmatpush1.msra.mxu0 0.0
  %210 = vmatprep.subr.mxu0 0.0
  %211 = vmatpush1.msra.mxu0 0.0
  %212 = vmatprep.subr.mxu0 0.0
  %213 = vmatpush1.msra.mxu0 0.0
  %214 = vmatprep.subr.mxu0 0.0
  %215 = vmatpush1.msra.mxu0 0.0
  %216 = vmatprep.subr.mxu0 0.0
  %217 = vmatpush1.msra.mxu0 0.0
  %218 = vmatprep.subr.mxu0 0.0
  %219 = vmatpush1.msra.mxu0 0.0
  %220 = vmatprep.subr.mxu0 0.0
  %221 = vmatpush1.msra.mxu0 0.0
  %222 = vmatprep.subr.mxu0 0.0
  %223 = vmatpush1.msra.mxu0 0.0
  %224 = vmatprep.subr.mxu0 0.0
  %225 = vmatpush1.msra.mxu0 0.0
  %226 = vmatprep.subr.mxu0 0.0
  %227 = vmatpush1.msra.mxu0 0.0
  %228 = vmatprep.subr.mxu0 0.0
  %229 = vmatpush1.msra.mxu0 0.0
  %230 = vmatprep.subr.mxu0 0.0
  %231 = vmatpush1.msra.mxu0 0.0
  %232 = vmatprep.subr.mxu0 0.0
  %233 = vmatpush1.msra.mxu0 0.0
  %234 = vmatprep.subr.mxu0 0.0
  %235 = vmatpush1.msra.mxu0 0.0
  %236 = vmatprep.subr.mxu0 0.0
  %237 = vmatpush1.msra.mxu0 0.0
  %238 = vmatprep.subr.mxu0 0.0
  %239 = vmatpush1.msra.mxu0 0.0
  %240 = vmatprep.subr.mxu0 0.0
  %241 = vmatpush1.msra.mxu0 0.0
  %242 = vmatprep.subr.mxu0 0.0
  %243 = vmatpush1.msra.mxu0 0.0
  %244 = vmatprep.subr.mxu0 0.0
  %245 = vmatpush1.msra.mxu0 0.0
  %246 = vmatprep.subr.mxu0 0.0
  %247 = vmatpush1.msra.mxu0 0.0
  %248 = vmatprep.subr.mxu0 0.0
  %249 = vmatpush1.msra.mxu0 0.0
  %250 = vmatprep.subr.mxu0 0.0
  %251 = vmatpush1.msra.mxu0 0.0
  %252 = vmatprep.subr.mxu0 0.0
  %253 = vmatpush1.msra.mxu0 0.0
  %254 = vmatprep.subr.mxu0 0.0
  %255 = vmatpush1.msra.mxu0 0.0
  %256 = vmatprep.subr.mxu0 0.0
  %257 = vmatpush1.msra.mxu0 0.0
  %258 = vmatprep.subr.mxu0 0.0
  %259 = vmatpush1.msra.mxu0 0.0
  %260 = vmatprep.mubr.f32.mxu0 0.0
  %261 = vmatmul.mubr.f32.gmra.mrb[0].mxu0 %v122
  %v262 = vpop.f32.mrb[0].mxu0
  %v263 = vadd.f32 0.0, %v262
  %v264 = vpop.f32.mrb[0].mxu0
  %265 = vmatprep.mubr.f32.mxu0 0.0
  %266 = vmatmul.mubr.f32.gmra.mrb[0].mxu0 %v125
  %v267 = vpop.f32.mrb[0].mxu0
  %v268 = vadd.f32 0.0, %v267
  %v269 = vpop.f32.mrb[0].mxu0
  %270 = vmatprep.mubr.f32.mxu0 0.0
  %271 = vmatmul.mubr.f32.gmra.mrb[0].mxu0 %v128
  %v272 = vpop.f32.mrb[0].mxu0
  %v273 = vadd.f32 0.0, %v272
  %v274 = vpop.f32.mrb[0].mxu0
  %275 = vmatprep.mubr.f32.mxu0 0.0
  %276 = vmatmul.mubr.f32.gmra.mrb[0].mxu0 %v131
  %v277 = vpop.f32.mrb[0].mxu0
  %v278 = vadd.f32 0.0, %v277
  %v279 = vpop.f32.mrb[0].mxu0
  %280 = vmatprep.mubr.f32.mxu0 0.0
  %281 = vmatmul.mubr.f32.gmra.mrb[0].mxu0 %v134
  %v282 = vpop.f32.mrb[0].mxu0
  %v283 = vadd.f32 0.0, %v282
  %v284 = vpop.f32.mrb[0].mxu0
  %285 = vmatprep.mubr.f32.mxu0 0.0
  %286 = vmatmul.mubr.f32.gmra.mrb[0].mxu0 %v137
  %v287 = vpop.f32.mrb[0].mxu0
  %v288 = vadd.f32 0.0, %v287
  %v289 = vpop.f32.mrb[0].mxu0
  %290 = vmatprep.mubr.f32.mxu0 0.0
  %291 = vmatmul.mubr.f32.gmra.mrb[0].mxu0 %v140
  %v292 = vpop.f32.mrb[0].mxu0
  %v293 = vadd.f32 0.0, %v292
  %v294 = vpop.f32.mrb[0].mxu0
  %295 = vmatprep.mubr.f32.mxu0 0.0
  %296 = vmatmul.mubr.f32.gmra.mrb[0].mxu0 %v143
  %v297 = vpop.f32.mrb[0].mxu0
  %v298 = vadd.f32 0.0, %v297
  %v299 = vpop.f32.mrb[0].mxu0
  %300 = vmatprep.mubr.f32.mxu0 0.0
  %301 = vmatmul.mubr.f32.gmra.mrb[0].mxu0 %v146
  %v302 = vpop.f32.mrb[0].mxu0
  %v303 = vadd.f32 0.0, %v302
  %v304 = vpop.f32.mrb[0].mxu0
  %305 = vmatprep.mubr.f32.mxu0 0.0
  %306 = vmatmul.mubr.f32.gmra.mrb[0].mxu0 %v149
  %v307 = vpop.f32.mrb[0].mxu0
  %v308 = vadd.f32 0.0, %v307
  %v309 = vpop.f32.mrb[0].mxu0
  %310 = vmatprep.mubr.f32.mxu0 0.0
  %311 = vmatmul.mubr.f32.gmra.mrb[0].mxu0 %v152
  %v312 = vpop.f32.mrb[0].mxu0
  %v313 = vadd.f32 0.0, %v312
  %v314 = vpop.f32.mrb[0].mxu0
  %315 = vmatprep.mubr.f32.mxu0 0.0
  %316 = vmatmul.mubr.f32.gmra.mrb[0].mxu0 %v155
  %v317 = vpop.f32.mrb[0].mxu0
  %v318 = vadd.f32 0.0, %v317
  %v319 = vpop.f32.mrb[0].mxu0
  %320 = vmatprep.mubr.f32.mxu0 0.0
  %321 = vmatmul.mubr.f32.gmra.mrb[0].mxu0 %v158
  %v322 = vpop.f32.mrb[0].mxu0
  %v323 = vadd.f32 0.0, %v322
  %v324 = vpop.f32.mrb[0].mxu0
  %325 = vmatprep.mubr.f32.mxu0 0.0
  %326 = vmatmul.mubr.f32.gmra.mrb[0].mxu0 %v161
  %v327 = vpop.f32.mrb[0].mxu0
  %v328 = vadd.f32 0.0, %v327
  %v329 = vpop.f32.mrb[0].mxu0
  %330 = vmatprep.mubr.f32.mxu0 0.0
  %331 = vmatmul.mubr.f32.gmra.mrb[0].mxu0 %v164
  %v332 = vpop.f32.mrb[0].mxu0
  %v333 = vadd.f32 0.0, %v332
  %v334 = vpop.f32.mrb[0].mxu0
  %335 = vmatprep.mubr.f32.mxu0 0.0
  %336 = vmatmul.mubr.f32.gmra.mrb[0].mxu0 %v167
  %v337 = vpop.f32.mrb[0].mxu0
  %v338 = vadd.f32 0.0, %v337
  %v339 = vpop.f32.mrb[0].mxu0
  %340 = vmatprep.mubr.f32.mxu0 0.0
  %341 = vmatmul.mubr.f32.gmra.mrb[0].mxu0 %v170
  %v342 = vpop.f32.mrb[0].mxu0
  %v343 = vadd.f32 0.0, %v342
  %v344 = vpop.f32.mrb[0].mxu0
  %345 = vmatprep.mubr.f32.mxu0 0.0
  %346 = vmatmul.mubr.f32.gmra.mrb[0].mxu0 %v173
  %v347 = vpop.f32.mrb[0].mxu0
  %v348 = vadd.f32 0.0, %v347
  %v349 = vpop.f32.mrb[0].mxu0
  %350 = vmatprep.mubr.f32.mxu0 0.0
  %351 = vmatmul.mubr.f32.gmra.mrb[0].mxu0 %v176
  %v352 = vpop.f32.mrb[0].mxu0
  %v353 = vadd.f32 0.0, %v352
  %v354 = vpop.f32.mrb[0].mxu0
  %355 = vmatprep.mubr.f32.mxu0 0.0
  %356 = vmatmul.mubr.f32.gmra.mrb[0].mxu0 %v179
  %v357 = vpop.f32.mrb[0].mxu0
  %v358 = vadd.f32 0.0, %v357
  %v359 = vpop.f32.mrb[0].mxu0
  %360 = vmatprep.mubr.f32.mxu0 0.0
  %361 = vmatmul.mubr.f32.gmra.mrb[0].mxu0 %v182
  %v362 = vpop.f32.mrb[0].mxu0
  %v363 = vadd.f32 0.0, %v362
  %v364 = vpop.f32.mrb[0].mxu0
  %365 = vmatprep.mubr.f32.mxu0 0.0
  %366 = vmatmul.mubr.f32.gmra.mrb[0].mxu0 %v185
  %v367 = vpop.f32.mrb[0].mxu0
  %v368 = vadd.f32 0.0, %v367
  %v369 = vpop.f32.mrb[0].mxu0
  %370 = vmatprep.mubr.f32.mxu0 0.0
  %371 = vmatmul.mubr.f32.gmra.mrb[0].mxu0 %v188
  %v372 = vpop.f32.mrb[0].mxu0
  %v373 = vadd.f32 0.0, %v372
  %v374 = vpop.f32.mrb[0].mxu0
  %375 = vmatprep.mubr.f32.mxu0 0.0
  %376 = vmatmul.mubr.f32.gmra.mrb[0].mxu0 %v191
  %v377 = vpop.f32.mrb[0].mxu0
  %v378 = vadd.f32 0.0, %v377
  %v379 = vpop.f32.mrb[0].mxu0
  %380 = vmatprep.mubr.f32.mxu0 0.0
  %381 = vmatmul.mubr.f32.gmra.mrb[0].mxu0 %v194
  %v382 = vpop.f32.mrb[0].mxu0
  %v383 = vadd.f32 0.0, %v382
  %v384 = vpop.f32.mrb[0].mxu0
  %385 = vdwg.mxu0
  %v386 = vsub.f32 %v263, %v95
  %v387 = vsub.f32 %v268, %v96
  %v388 = vsub.f32 %v273, %v97
  %v389 = vsub.f32 %v278, %v98
  %v390 = vsub.f32 %v283, %v99
  %v391 = vsub.f32 %v288, %v100
  %v392 = vsub.f32 %v293, %v101
  %v393 = vsub.f32 %v298, %v102
  %v394 = vsub.f32 %v303, %v103
  %v395 = vsub.f32 %v308, %v104
  %v396 = vsub.f32 %v313, %v105
  %v397 = vsub.f32 %v318, %v106
  %v398 = vsub.f32 %v323, %v107
  %v399 = vsub.f32 %v328, %v108
  %v400 = vsub.f32 %v333, %v109
  %v401 = vsub.f32 %v338, %v110
  %v402 = vsub.f32 %v343, %v111
  %v403 = vsub.f32 %v348, %v112
  %v404 = vsub.f32 %v353, %v113
  %v405 = vsub.f32 %v358, %v114
  %v406 = vsub.f32 %v363, %v115
  %v407 = vsub.f32 %v368, %v116
  %v408 = vsub.f32 %v373, %v117
  %v409 = vsub.f32 %v378, %v118
  %v410 = vsub.f32 %v383, %v119
  %v411 = vmax.f32 %v386, 0.0
  %v412 = vmax.f32 %v387, 0.0
  %v413 = vmax.f32 %v388, 0.0
  %v414 = vmax.f32 %v389, 0.0
  %v415 = vmax.f32 %v390, 0.0
  %v416 = vmax.f32 %v391, 0.0
  %v417 = vmax.f32 %v392, 0.0
  %v418 = vmax.f32 %v393, 0.0
  %v419 = vmax.f32 %v394, 0.0
  %v420 = vmax.f32 %v395, 0.0
  %v421 = vmax.f32 %v396, 0.0
  %v422 = vmax.f32 %v397, 0.0
  %v423 = vmax.f32 %v398, 0.0
  %v424 = vmax.f32 %v399, 0.0
  %v425 = vmax.f32 %v400, 0.0
  %v426 = vmax.f32 %v401, 0.0
  %v427 = vmax.f32 %v402, 0.0
  %v428 = vmax.f32 %v403, 0.0
  %v429 = vmax.f32 %v404, 0.0
  %v430 = vmax.f32 %v405, 0.0
  %v431 = vmax.f32 %v406, 0.0
  %v432 = vmax.f32 %v407, 0.0
  %v433 = vmax.f32 %v408, 0.0
  %v434 = vmax.f32 %v409, 0.0
  %v435 = vmax.f32 %v410, 0.0
  %v436 = vld [vmem:[#allocation2] sm:$0x1]
  %vm437 = vcmask 130048
  %v438 = vsel %vm437, %v411, 0.0
  %v439 = vsel %vm437, %v412, 0.0
  %v440 = vadd.f32 %v438, %v439
  %v441 = vsel %vm437, %v413, 0.0
  %v442 = vadd.f32 %v440, %v441
  %v443 = vsel %vm437, %v414, 0.0
  %v444 = vadd.f32 %v442, %v443
  %v445 = vsel %vm437, %v415, 0.0
  %v446 = vadd.f32 %v444, %v445
  %v447 = vsel %vm437, %v416, 0.0
  %v448 = vadd.f32 %v446, %v447
  %v449 = vsel %vm437, %v417, 0.0
  %v450 = vadd.f32 %v448, %v449
  %v451 = vsel %vm437, %v418, 0.0
  %v452 = vadd.f32 %v450, %v451
  %v453 = vsel %vm437, %v419, 0.0
  %v454 = vadd.f32 %v452, %v453
  %v455 = vsel %vm437, %v420, 0.0
  %v456 = vadd.f32 %v454, %v455
  %v457 = vsel %vm437, %v421, 0.0
  %v458 = vadd.f32 %v456, %v457
  %v459 = vsel %vm437, %v422, 0.0
  %v460 = vadd.f32 %v458, %v459
  %v461 = vsel %vm437, %v423, 0.0
  %v462 = vadd.f32 %v460, %v461
  %v463 = vsel %vm437, %v424, 0.0
  %v464 = vadd.f32 %v462, %v463
  %v465 = vsel %vm437, %v425, 0.0
  %v466 = vadd.f32 %v464, %v465
  %v467 = vsel %vm437, %v426, 0.0
  %v468 = vadd.f32 %v466, %v467
  %v469 = vsel %vm437, %v427, 0.0
  %v470 = vadd.f32 %v468, %v469
  %v471 = vsel %vm437, %v428, 0.0
  %v472 = vadd.f32 %v470, %v471
  %v473 = vsel %vm437, %v429, 0.0
  %v474 = vadd.f32 %v472, %v473
  %v475 = vsel %vm437, %v430, 0.0
  %v476 = vadd.f32 %v474, %v475
  %v477 = vsel %vm437, %v431, 0.0
  %v478 = vadd.f32 %v476, %v477
  %v479 = vsel %vm437, %v432, 0.0
  %v480 = vadd.f32 %v478, %v479
  %v481 = vsel %vm437, %v433, 0.0
  %v482 = vadd.f32 %v480, %v481
  %v483 = vsel %vm437, %v434, 0.0
  %v484 = vadd.f32 %v482, %v483
  %v485 = vsel %vm437, %v435, 0.0
  %v486 = vadd.f32 %v484, %v485
  %v487 = vrot.slane %v486, 4
  %v488 = vadd.f32 %v486, %v487
  %v489 = vrot.slane %v488, 2
  %v490 = vadd.f32 %v488, %v489
  %v491 = vrot.slane %v490, 1
  %v492 = vadd.f32 %v490, %v491
  %v493 = vadd.f32 %v436, %v492
  %vm494 = vcmask 122880
  %495 = vst.msk [vmem:[#allocation2] sm:$0x1] %vm494, %v493
  %v496 = vld [vmem:[#allocation3] sm:$0x1]
  %vm497 = vcmask 138240
  %v498 = vsel %vm497, %v263, 0.0
  %v499 = vsel %vm497, %v268, 0.0
  %v500 = vadd.f32 %v498, %v499
  %v501 = vsel %vm497, %v273, 0.0
  %v502 = vadd.f32 %v500, %v501
  %v503 = vsel %vm497, %v278, 0.0
  %v504 = vadd.f32 %v502, %v503
  %v505 = vsel %vm497, %v283, 0.0
  %v506 = vadd.f32 %v504, %v505
  %v507 = vsel %vm497, %v288, 0.0
  %v508 = vadd.f32 %v506, %v507
  %v509 = vsel %vm497, %v293, 0.0
  %v510 = vadd.f32 %v508, %v509
  %v511 = vsel %vm497, %v298, 0.0
  %v512 = vadd.f32 %v510, %v511
  %v513 = vsel %vm497, %v303, 0.0
  %v514 = vadd.f32 %v512, %v513
  %v515 = vsel %vm497, %v308, 0.0
  %v516 = vadd.f32 %v514, %v515
  %v517 = vsel %vm497, %v313, 0.0
  %v518 = vadd.f32 %v516, %v517
  %v519 = vsel %vm497, %v318, 0.0
  %v520 = vadd.f32 %v518, %v519
  %v521 = vsel %vm497, %v323, 0.0
  %v522 = vadd.f32 %v520, %v521
  %v523 = vsel %vm497, %v328, 0.0
  %v524 = vadd.f32 %v522, %v523
  %v525 = vsel %vm497, %v333, 0.0
  %v526 = vadd.f32 %v524, %v525
  %v527 = vsel %vm497, %v338, 0.0
  %v528 = vadd.f32 %v526, %v527
  %v529 = vsel %vm497, %v343, 0.0
  %v530 = vadd.f32 %v528, %v529
  %v531 = vsel %vm497, %v348, 0.0
  %v532 = vadd.f32 %v530, %v531
  %v533 = vsel %vm497, %v353, 0.0
  %v534 = vadd.f32 %v532, %v533
  %v535 = vsel %vm497, %v358, 0.0
  %v536 = vadd.f32 %v534, %v535
  %v537 = vsel %vm497, %v363, 0.0
  %v538 = vadd.f32 %v536, %v537
  %v539 = vsel %vm497, %v368, 0.0
  %v540 = vadd.f32 %v538, %v539
  %v541 = vsel %vm497, %v373, 0.0
  %v542 = vadd.f32 %v540, %v541
  %v543 = vsel %vm497, %v378, 0.0
  %v544 = vadd.f32 %v542, %v543
  %v545 = vsel %vm497, %v383, 0.0
  %v546 = vadd.f32 %v544, %v545
  %v547 = vrot.slane %v546, 4
  %v548 = vadd.f32 %v546, %v547
  %v549 = vrot.slane %v548, 2
  %v550 = vadd.f32 %v548, %v549
  %v551 = vrot.slane %v550, 1
  %v552 = vadd.f32 %v550, %v551
  %v555 = vunpack.c.l.s4 1966171168
  %v556 = vunpack.c.0.s8 %v555
  %v557 = vlaneseq
  %v558 = vshrl.u32 %v557, 7
  %v559 = vsub.s32 %v556, %v558
  %v560 = vrot.slane %v552, %v559
  %v562 = vunpack.c.l.s4 1966171168
  %v563 = vunpack.c.0.s8 %v562
  %v564 = vlaneseq
  %v565 = vshrl.u32 %v564, 7
  %v566 = vsub.s32 %v563, %v565
  %v567 = vrot.slane %v560, %v566
  %568 = vrot.lane.b32.xlu0 %v567, 112
  %v569 = vpop.permute.xlu0 %568
  %v571 = vadd.f32 %v496, %v569
  %vm572 = vcmask 0
  %573 = vst.msk [vmem:[#allocation3] sm:$0x1] %vm572, %v571
  // Predicated region
  $region18: #{loss_fn.1} parent=0 // pred_check
    %p574 = pneg %p58
  $region19: #{loss_fn.1} parent=0 // pred_check_branch
    %576 = sbr.rel (%p574) target = $region21
  $region20: #{loss_fn.1} parent=0 // pred_region
    %v577 = vld [vmem:[#allocation2] sm:$0x1]
    %v578 = vsel %vm494, %v577, 0.0
    %579 = vadd.xlane.f32.xlu0 %v578
    %v580 = vpop.xlane.xlu0 %579
    %v581 = vmul.f32 %v580, 50.0
    %v582 = vld [vmem:[#allocation3] sm:$0x1]
    %v583 = vsub.f32 %v581, %v582
    %585 = vset.pattern.permute.xlu0 0
    %586 = vperm.xlu0 %585, %v583
    %v587 = vpop.permute.xlu0 %586
    %589 = vst [vmem:[%s3] sm:$0x1] %v587
  $region21: #{loss_fn.1} parent=0 // pred_fallthru
    _
  // Predicated region
  $region22: #{loss_fn.1} parent=0 // pred_check
    _
  $region23: #{loss_fn.1} parent=0 // pred_check_branch
    %591 = sbr.rel (0) target = $region25
  $region24: #{loss_fn.1} parent=0 // pred_region
    _
  $region25: #{loss_fn.1} parent=0 // pred_fallthru
    _
  // Predicated region
  $region26: #{loss_fn.1} parent=0 // pred_check
    _
  $region27: #{loss_fn.1} parent=0 // pred_check_branch
    %593 = sbr.rel (0) target = $region29
  $region28: #{loss_fn.1} parent=0 // pred_region
    _
  $region29: #{loss_fn.1} parent=0 // pred_fallthru
    _

</llo_original>
